<compile_context>
chip_gen: v6e
topology: v6e:2x2x1
jax: 0.10.0
libtpu: 0.0.40
codegen_flags: <defaults>
</compile_context>

<pallas_src>
import functools

import jax
import jax.numpy as jnp
from jax.experimental import pallas as pl
from jax.experimental.pallas import tpu as pltpu

BBOX = "bbox"
IMAGE = "image"

_COMPILER_PARAMS = pltpu.CompilerParams(
    # M-tiles are independent -> shard across TensorCores on v7x megacore.
    dimension_semantics=("parallel",),
    # Per-step buffers are < 1 MiB even at TM=4096, far under this budget on
    # every generation (v7x physical VMEM is 64 MiB).
    vmem_limit_bytes=32 * 1024 * 1024,
)


def _round_up(x, m):
    return ((x + m - 1) // m) * m


# ----------------------------------------------------------------------------
# Fused detector kernel (transposed layout: rows = channels/coords, lanes = M)
# ----------------------------------------------------------------------------
def _fused_detector_kernel(p_ref, w1_ref, b1_ref, w2_ref, b2_ref, wh_ref,
                           bh_ref, anch_ref, asz_ref, hsz_ref, bmax_ref,
                           out_ref, *, num_classes, delta_clip):
    # Stem projection (4x4 patchify conv) + ReLU.
    # bf16 operands from HBM, f32 accumulate on the MXU.
    f1 = jnp.dot(w1_ref[...], p_ref[...], preferred_element_type=jnp.float32)
    f1 = jnp.maximum(f1 + b1_ref[...], 0.0)

    # 1x1 conv + ReLU; features stay resident in VMEM/vregs (f32).
    f2 = jnp.dot(w2_ref[...], f1, preferred_element_type=jnp.float32)
    f2 = jnp.maximum(f2 + b2_ref[...], 0.0)

    # Both heads in one matmul: rows [0:4] = reg deltas, rows [4:4+nc] = logits.
    acc = jnp.dot(wh_ref[...], f2, preferred_element_type=jnp.float32) + bh_ref[...]
    reg = acc[0:4, :]
    logits = acc[4:4 + num_classes, :]

    # Numerically stable sigmoid (f32 elementwise -> EUP exp + VPU).
    z = jnp.exp(-jnp.abs(logits))
    r = 1.0 / (1.0 + z)
    scores = jnp.where(logits >= 0.0, r, z * r)

    # Box decode as 4-wide slab math (no per-column concats, no int div/mod):
    #   reg rows are [dx, dy, dw, dh]; build [dx,dy,dx,dy] and [dw,dh,dw,dh].
    dxy = reg[0:2, :]
    dwh = jnp.clip(reg[2:4, :], -delta_clip, delta_clip)   # mmdet wh_ratio_clip
    dxy4 = jnp.concatenate([dxy, dxy], axis=0)              # (4, tm)
    dwh4 = jnp.concatenate([dwh, dwh], axis=0)              # (4, tm)
    # anch_ref rows are rescaled anchor centers [cx, cy, cx, cy]; asz/hsz fold
    # anchor size, the +-0.5 corner sign and the 1/scale rescale per coord.
    # TODO(synk): mmdet's DeltaXYWHBBoxCoder target means/stds are assumed
    # (0,0,0,0)/(1,1,1,1) here.
    boxes = anch_ref[...] + dxy4 * asz_ref[...] + hsz_ref[...] * jnp.exp(dwh4)
    # clip_border=True: clamp to the original image extent (already rescaled).
    boxes = jnp.minimum(jnp.maximum(boxes, 0.0), bmax_ref[...])

    pieces = [boxes.astype(out_ref.dtype), scores.astype(out_ref.dtype)]
    pad_rows = out_ref.shape[0] - 4 - num_classes
    if pad_rows > 0:
        pieces.append(jnp.zeros((pad_rows, boxes.shape[1]), out_ref.dtype))
    # Single lane-dense store: (n_out_pad, tm) with the detection index on the
    # 128-lane axis -> full-width vst for tm that is a multiple of 128.
    out_ref[...] = jnp.concatenate(pieces, axis=0)


def fused_detector(patches_t, w1_t, b1, w2_t, b2, wh_t, bh, anch, asz, hsz,
                   bmax, *, num_classes, delta_clip=4.135, tm_max=4096):
    """patches_t: (K, M) bf16 transposed patch matrix; returns (n_out_pad, M) f32."""
    K, M = patches_t.shape
    c1 = w1_t.shape[0]
    c2 = w2_t.shape[0]
    n_out_pad = wh_t.shape[0]

    # Lane tiling over M = B*L detections.  No padding / slicing:
    #  - small M: one block equal to the full array extent (always legal),
    #  - large M: 128-multiple tiles; Pallas masks the ragged last block; keep
    #    at least 2 grid steps so v7x megacore gets both TensorCores busy.
    if M <= 256:
        tm = M
    else:
        tm = min(tm_max, _round_up(-(-M // 2), 128))
    grid = -(-M // tm)

    kernel = functools.partial(_fused_detector_kernel,
                               num_classes=num_classes,
                               delta_clip=float(delta_clip))

    return pl.pallas_call(
        kernel,
        out_shape=jax.ShapeDtypeStruct((n_out_pad, M), jnp.float32),
        grid=(grid,),
        in_specs=[
            pl.BlockSpec((K, tm), lambda i: (0, i)),          # patch stream (bf16)
            pl.BlockSpec((c1, K), lambda i: (0, 0)),          # w1 (bf16)
            pl.BlockSpec((c1, 1), lambda i: (0, 0)),          # b1
            pl.BlockSpec((c2, c1), lambda i: (0, 0)),         # w2
            pl.BlockSpec((c2, 1), lambda i: (0, 0)),          # b2
            pl.BlockSpec((n_out_pad, c2), lambda i: (0, 0)),  # heads weight
            pl.BlockSpec((n_out_pad, 1), lambda i: (0, 0)),   # heads bias
            pl.BlockSpec((4, tm), lambda i: (0, i)),          # rescaled anchor centers
            pl.BlockSpec((4, 1), lambda i: (0, 0)),           # scaled anchor size
            pl.BlockSpec((4, 1), lambda i: (0, 0)),           # signed half-size
            pl.BlockSpec((4, 1), lambda i: (0, 0)),           # border clip max
        ],
        out_specs=pl.BlockSpec((n_out_pad, tm), lambda i: (0, i)),
        compiler_params=_COMPILER_PARAMS,
    )(patches_t, w1_t, b1, w2_t, b2, wh_t, bh, anch, asz, hsz, bmax)


# ----------------------------------------------------------------------------
# Synthetic detector standing in for the mmdet `build_detector` model
# ----------------------------------------------------------------------------
class SyntheticMMDetDetector:
    PATCH = 4          # 4x4 non-overlapping patchify stem (feature stride 4)

    def __init__(self, prefix: str, num_classes: int = 4, in_ch: int = 3,
                 c1: int = 16, c2: int = 32, seed: int = 0):
        self.prefix = prefix
        self.num_classes = num_classes
        self.id2label = dict(zip(range(num_classes), range(num_classes)))
        self.in_ch, self.c1, self.c2 = in_ch, c1, c2

        P = self.PATCH
        K = in_ch * P * P
        key = jax.random.PRNGKey(seed)
        k = jax.random.split(key, 8)
        s = 0.05
        # All weights are stored transposed (out_ch, in_ch) to match the
        # lane-dense (channels x M) pipeline.
        self.w1_t = (s * jax.random.normal(k[0], (c1, K))).astype(jnp.float32)
        self.b1 = (s * jax.random.normal(k[1], (c1, 1))).astype(jnp.float32)
        self.w2_t = (s * jax.random.normal(k[2], (c2, c1))).astype(jnp.float32)
        self.b2 = (s * jax.random.normal(k[3], (c2, 1))).astype(jnp.float32)
        # Heads (1x1 convs): reg (4 rows) and cls (nc rows), concatenated so a
        # single matmul serves both; padded to a full 8-sublane output slab.
        wr = (s * jax.random.normal(k[4], (4, c2))).astype(jnp.float32)
        br = (s * jax.random.normal(k[5], (4, 1))).astype(jnp.float32)
        wc = (s * jax.random.normal(k[6], (num_classes, c2))).astype(jnp.float32)
        bc = (s * jax.random.normal(k[7], (num_classes, 1))).astype(jnp.float32)
        self.n_out_pad = _round_up(4 + num_classes, 8)
        wh = jnp.concatenate([wr, wc], axis=0)
        bh = jnp.concatenate([br, bc], axis=0)
        pad = self.n_out_pad - (4 + num_classes)
        if pad > 0:
            wh = jnp.concatenate([wh, jnp.zeros((pad, c2), jnp.float32)], axis=0)
            bh = jnp.concatenate([bh, jnp.zeros((pad, 1), jnp.float32)], axis=0)
        self.wh_t, self.bh = wh, bh
        # bf16 copy of the stem weight (MXU operand paired with the bf16
        # patch stream); everything downstream stays f32.
        self.w1_bf16 = self.w1_t.astype(jnp.bfloat16)

    def detect(self, img_nchw, scale_factor, ori_shape, rescale=True):
        """img_nchw: (B, C, H, W) f32 -> scores (B, L, nc), boxes (B, L, 4)."""
        B, C, H, W = img_nchw.shape
        P = self.PATCH
        assert H % P == 0 and W % P == 0, "synthetic stem needs H, W divisible by 4"
        fh, fw = H // P, W // P
        L = fh * fw
        M = B * L

        # Non-overlapping patchify -> transposed (K, M) patch matrix.  One
        # relayout pass over the input (no im2col inflation), fused with the
        # f32->bf16 cast by XLA.
        xr = img_nchw.astype(jnp.float32).reshape(B, C, fh, P, fw, P)
        patches_t = jnp.transpose(xr, (1, 3, 5, 0, 2, 4)).reshape(C * P * P, M)
        patches_t = patches_t.astype(jnp.bfloat16)

        # Anchor grid (one 16px square anchor per stride-4 location) with the
        # 1/scale rescale folded in; built once host-side (tiny iota work) so
        # the kernel needs no integer div/mod.
        stride = float(P)
        anchor_size = 4.0 * stride
        if rescale:
            sf = jnp.asarray(scale_factor, dtype=jnp.float32).reshape(-1)
            if sf.shape[0] == 1:
                sf = jnp.tile(sf, 4)                      # scalar -> (sx, sy, sx, sy)
            sxi = 1.0 / sf[0]
            syi = 1.0 / sf[1]
        else:
            sxi = jnp.float32(1.0)
            syi = jnp.float32(1.0)
        ax = (jnp.arange(fw, dtype=jnp.float32) + 0.5) * stride
        ay = (jnp.arange(fh, dtype=jnp.float32) + 0.5) * stride
        cx = jnp.broadcast_to(ax[None, :], (fh, fw)).reshape(L)
        cy = jnp.broadcast_to(ay[:, None], (fh, fw)).reshape(L)
        anch = jnp.stack([cx * sxi, cy * syi, cx * sxi, cy * syi], axis=0)  # (4, L)
        anch = jnp.tile(anch, (1, B))                                       # (4, M)
        asz = jnp.stack([anchor_size * sxi, anchor_size * syi,
                         anchor_size * sxi, anchor_size * syi]).reshape(4, 1)
        hsz = asz * jnp.array([[-0.5], [-0.5], [0.5], [0.5]], jnp.float32)
        ow, oh = float(ori_shape[1]), float(ori_shape[0])
        bmax = jnp.array([[ow], [oh], [ow], [oh]], jnp.float32)

        out = fused_detector(patches_t, self.w1_bf16, self.b1, self.w2_t,
                             self.b2, self.wh_t, self.bh, anch, asz, hsz, bmax,
                             num_classes=self.num_classes)   # (n_out_pad, M)

        boxes = jnp.transpose(out[0:4, :].reshape(4, B, L), (1, 2, 0))
        scores = jnp.transpose(
            out[4:4 + self.num_classes, :].reshape(self.num_classes, B, L),
            (1, 2, 0))
        return scores, boxes


# ----------------------------------------------------------------------------
# Wrapper reproducing MMDetAutoModelForObjectDetection.forward semantics
# ----------------------------------------------------------------------------
class MMDetAutoModelForObjectDetectionPallas:
    def __init__(self, prefix: str, checkpoint_name: str, num_classes=4,
                 pretrained=True):
        self.prefix = prefix
        self.checkpoint_name = checkpoint_name
        self.pretrained = pretrained
        self.num_classes = num_classes
        # TODO(synk): the real module builds an arbitrary mmdet detector from a
        # downloaded config/checkpoint; here we use a deterministic synthetic one.
        self.model = SyntheticMMDetDetector(prefix, num_classes=num_classes)
        self.id2label = dict(zip(range(num_classes), range(num_classes)))

    @property
    def image_key(self):
        return f"{self.prefix}_{IMAGE}"

    def forward(self, batch: dict):
        data = batch[self.image_key]
        img_metas = data["img_metas"][0]          # mimic `img_metas.data[0]`
        img = data["img"][0]                      # mimic `img.data[0]`  (B,C,H,W)
        meta0 = img_metas[0]
        scale_factor = meta0["scale_factor"]
        ori_shape = meta0.get("ori_shape",
                              (img.shape[2], img.shape[3], img.shape[1]))

        scores, boxes = self.model.detect(img, scale_factor, ori_shape,
                                          rescale=True)
        B, L, nc = scores.shape

        # mmdet result format: per image, list over classes of (N, 5) arrays.
        # Built with one broadcasted concatenate + transpose (no per-class
        # device-op loop).  TODO(synk): the real detector also runs test_cfg
        # per-class NMS here; we return all dense predictions instead.
        dets = jnp.concatenate(
            [jnp.broadcast_to(boxes[:, :, None, :], (B, L, nc, 4)),
             scores[..., None]], axis=-1)         # (B, L, nc, 5)
        dets = jnp.transpose(dets, (0, 2, 1, 3))  # (B, nc, L, 5)
        results = [[dets[b, c] for c in range(nc)] for b in range(B)]

        return {self.prefix: {BBOX: results}}


# ----------------------------------------------------------------------------
if __name__ == "__main__":
    key = jax.random.PRNGKey(0)
    B, C, H, W = 2, 3, 16, 16
    img = jax.random.normal(key, (B, C, H, W), dtype=jnp.float32)

    prefix = "mmdet_image"
    img_metas = [
        [dict(ori_shape=(H, W, C), img_shape=(H, W, C), scale_factor=2.0)
         for _ in range(B)]
    ]
    batch = {f"{prefix}_{IMAGE}": {"img": [img], "img_metas": img_metas}}

    model = MMDetAutoModelForObjectDetectionPallas(
        prefix=prefix, checkpoint_name="synthetic_tiny_detector",
        num_classes=4, pretrained=False)
    out = model.forward(batch)

    results = out[prefix][BBOX]
    assert len(results) == B
    assert len(results[0]) == model.num_classes
    assert results[0][0].shape[-1] == 5
    jax.block_until_ready(results[0][0])
    jax.block_until_ready(results[-1][-1])

    print("KERNEL_OK")
</pallas_src>

<mosaic_0001>
module attributes {stable_mosaic.version = 11 : i64} {
  func.func @_fused_detector_kernel(%arg0: i32, %arg1: memref<48x32xbf16, #tpu.memory_space<vmem>>, %arg2: memref<16x48xbf16, #tpu.memory_space<vmem>>, %arg3: memref<16x1xf32, #tpu.memory_space<vmem>>, %arg4: memref<32x16xf32, #tpu.memory_space<vmem>>, %arg5: memref<32x1xf32, #tpu.memory_space<vmem>>, %arg6: memref<8x32xf32, #tpu.memory_space<vmem>>, %arg7: memref<8x1xf32, #tpu.memory_space<vmem>>, %arg8: memref<4x32xf32, #tpu.memory_space<vmem>>, %arg9: memref<4x1xf32, #tpu.memory_space<vmem>>, %arg10: memref<4x1xf32, #tpu.memory_space<vmem>>, %arg11: memref<4x1xf32, #tpu.memory_space<vmem>>, %arg12: memref<8x32xf32, #tpu.memory_space<vmem>>) attributes {dimension_semantics = [#tpu.dimension_semantics<parallel>], iteration_bounds = array<i64: 1>, scalar_prefetch = 0 : i64, scratch_operands = 0 : i64, tpu.core_type = #tpu.core_type<tc>, window_params = [{transform_indices = @transform_0, window_bounds = array<i64: 48, 32>}, {pipeline_mode = #tpu.pipeline_mode<synchronous>, transform_indices = @transform_1, window_bounds = array<i64: 16, 48>}, {pipeline_mode = #tpu.pipeline_mode<synchronous>, transform_indices = @transform_2, window_bounds = array<i64: 16, 1>}, {pipeline_mode = #tpu.pipeline_mode<synchronous>, transform_indices = @transform_3, window_bounds = array<i64: 32, 16>}, {pipeline_mode = #tpu.pipeline_mode<synchronous>, transform_indices = @transform_4, window_bounds = array<i64: 32, 1>}, {pipeline_mode = #tpu.pipeline_mode<synchronous>, transform_indices = @transform_5, window_bounds = array<i64: 8, 32>}, {pipeline_mode = #tpu.pipeline_mode<synchronous>, transform_indices = @transform_6, window_bounds = array<i64: 8, 1>}, {transform_indices = @transform_7, window_bounds = array<i64: 4, 32>}, {pipeline_mode = #tpu.pipeline_mode<synchronous>, transform_indices = @transform_8, window_bounds = array<i64: 4, 1>}, {pipeline_mode = #tpu.pipeline_mode<synchronous>, transform_indices = @transform_9, window_bounds = array<i64: 4, 1>}, {pipeline_mode = #tpu.pipeline_mode<synchronous>, transform_indices = @transform_10, window_bounds = array<i64: 4, 1>}, {transform_indices = @transform_11, window_bounds = array<i64: 8, 32>}]} {
    %c0 = arith.constant 0 : index
    %c0_0 = arith.constant 0 : index
    %0 = vector.load %arg2[%c0, %c0_0] : memref<16x48xbf16, #tpu.memory_space<vmem>>, vector<16x48xbf16>
    %c0_1 = arith.constant 0 : index
    %c0_2 = arith.constant 0 : index
    %1 = vector.load %arg1[%c0_1, %c0_2] : memref<48x32xbf16, #tpu.memory_space<vmem>>, vector<48x32xbf16>
    %cst = arith.constant dense<0.000000e+00> : vector<16x32xf32>
    %2 = tpu.matmul %0, %1, %cst {dimension_numbers = #tpu.dot_dimension_numbers<[1], [0], [0], [1], [0, 0, 1, 1], [], []>} : vector<16x48xbf16>, vector<48x32xbf16>, vector<16x32xf32> -> vector<16x32xf32>
    %c0_3 = arith.constant 0 : index
    %c0_4 = arith.constant 0 : index
    %3 = vector.load %arg3[%c0_3, %c0_4] : memref<16x1xf32, #tpu.memory_space<vmem>>, vector<16x1xf32>
    %4 = vector.broadcast %3 : vector<16x1xf32> to vector<16x32xf32>
    %5 = arith.addf %2, %4 : vector<16x32xf32>
    %cst_5 = arith.constant 0.000000e+00 : f32
    %6 = vector.broadcast %cst_5 : f32 to vector<16x32xf32>
    %7 = arith.maximumf %5, %6 : vector<16x32xf32>
    %c0_6 = arith.constant 0 : index
    %c0_7 = arith.constant 0 : index
    %8 = vector.load %arg4[%c0_6, %c0_7] : memref<32x16xf32, #tpu.memory_space<vmem>>, vector<32x16xf32>
    %cst_8 = arith.constant dense<0.000000e+00> : vector<32x32xf32>
    %9 = tpu.matmul %8, %7, %cst_8 {dimension_numbers = #tpu.dot_dimension_numbers<[1], [0], [0], [1], [0, 0, 1, 1], [], []>} : vector<32x16xf32>, vector<16x32xf32>, vector<32x32xf32> -> vector<32x32xf32>
    %c0_9 = arith.constant 0 : index
    %c0_10 = arith.constant 0 : index
    %10 = vector.load %arg5[%c0_9, %c0_10] : memref<32x1xf32, #tpu.memory_space<vmem>>, vector<32x1xf32>
    %11 = vector.broadcast %10 : vector<32x1xf32> to vector<32x32xf32>
    %12 = arith.addf %9, %11 : vector<32x32xf32>
    %cst_11 = arith.constant 0.000000e+00 : f32
    %13 = vector.broadcast %cst_11 : f32 to vector<32x32xf32>
    %14 = arith.maximumf %12, %13 : vector<32x32xf32>
    %c0_12 = arith.constant 0 : index
    %c0_13 = arith.constant 0 : index
    %15 = vector.load %arg6[%c0_12, %c0_13] : memref<8x32xf32, #tpu.memory_space<vmem>>, vector<8x32xf32>
    %cst_14 = arith.constant dense<0.000000e+00> : vector<8x32xf32>
    %16 = tpu.matmul %15, %14, %cst_14 {dimension_numbers = #tpu.dot_dimension_numbers<[1], [0], [0], [1], [0, 0, 1, 1], [], []>} : vector<8x32xf32>, vector<32x32xf32>, vector<8x32xf32> -> vector<8x32xf32>
    %c0_15 = arith.constant 0 : index
    %c0_16 = arith.constant 0 : index
    %17 = vector.load %arg7[%c0_15, %c0_16] : memref<8x1xf32, #tpu.memory_space<vmem>>, vector<8x1xf32>
    %18 = vector.broadcast %17 : vector<8x1xf32> to vector<8x32xf32>
    %19 = arith.addf %16, %18 : vector<8x32xf32>
    %20 = vector.extract_strided_slice %19 {offsets = [0, 0], sizes = [4, 32], strides = [1, 1]} : vector<8x32xf32> to vector<4x32xf32>
    %21 = vector.extract_strided_slice %19 {offsets = [4, 0], sizes = [4, 32], strides = [1, 1]} : vector<8x32xf32> to vector<4x32xf32>
    %22 = math.absf %21 : vector<4x32xf32>
    %cst_17 = arith.constant 0.000000e+00 : f32
    %23 = vector.broadcast %cst_17 : f32 to vector<4x32xf32>
    %24 = arith.subf %23, %22 : vector<4x32xf32>
    %25 = math.exp %24 : vector<4x32xf32>
    %cst_18 = arith.constant 1.000000e+00 : f32
    %26 = vector.broadcast %cst_18 : f32 to vector<4x32xf32>
    %27 = arith.addf %26, %25 : vector<4x32xf32>
    %cst_19 = arith.constant 1.000000e+00 : f32
    %28 = vector.broadcast %cst_19 : f32 to vector<4x32xf32>
    %29 = arith.divf %28, %27 : vector<4x32xf32>
    %cst_20 = arith.constant 0.000000e+00 : f32
    %30 = vector.broadcast %cst_20 : f32 to vector<4x32xf32>
    %31 = arith.cmpf oge, %21, %30 : vector<4x32xf32>
    %32 = arith.mulf %25, %29 : vector<4x32xf32>
    %33 = arith.select %31, %29, %32 : vector<4x32xi1>, vector<4x32xf32>
    %34 = vector.extract_strided_slice %20 {offsets = [0, 0], sizes = [2, 32], strides = [1, 1]} : vector<4x32xf32> to vector<2x32xf32>
    %35 = vector.extract_strided_slice %20 {offsets = [2, 0], sizes = [2, 32], strides = [1, 1]} : vector<4x32xf32> to vector<2x32xf32>
    %cst_21 = arith.constant -4.135000e+00 : f32
    %cst_22 = arith.constant 4.135000e+00 : f32
    %36 = vector.broadcast %cst_21 : f32 to vector<2x32xf32>
    %37 = arith.maximumf %36, %35 : vector<2x32xf32>
    %38 = vector.broadcast %cst_22 : f32 to vector<2x32xf32>
    %39 = arith.minimumf %38, %37 : vector<2x32xf32>
    %40 = tpu.concatenate %34, %34 in 0 : vector<2x32xf32>, vector<2x32xf32> -> vector<4x32xf32>
    %41 = tpu.concatenate %39, %39 in 0 : vector<2x32xf32>, vector<2x32xf32> -> vector<4x32xf32>
    %c0_23 = arith.constant 0 : index
    %c0_24 = arith.constant 0 : index
    %42 = vector.load %arg8[%c0_23, %c0_24] : memref<4x32xf32, #tpu.memory_space<vmem>>, vector<4x32xf32>
    %c0_25 = arith.constant 0 : index
    %c0_26 = arith.constant 0 : index
    %43 = vector.load %arg9[%c0_25, %c0_26] : memref<4x1xf32, #tpu.memory_space<vmem>>, vector<4x1xf32>
    %44 = vector.broadcast %43 : vector<4x1xf32> to vector<4x32xf32>
    %45 = arith.mulf %40, %44 : vector<4x32xf32>
    %46 = arith.addf %42, %45 : vector<4x32xf32>
    %c0_27 = arith.constant 0 : index
    %c0_28 = arith.constant 0 : index
    %47 = vector.load %arg10[%c0_27, %c0_28] : memref<4x1xf32, #tpu.memory_space<vmem>>, vector<4x1xf32>
    %48 = math.exp %41 : vector<4x32xf32>
    %49 = vector.broadcast %47 : vector<4x1xf32> to vector<4x32xf32>
    %50 = arith.mulf %49, %48 : vector<4x32xf32>
    %51 = arith.addf %46, %50 : vector<4x32xf32>
    %cst_29 = arith.constant 0.000000e+00 : f32
    %52 = vector.broadcast %cst_29 : f32 to vector<4x32xf32>
    %53 = arith.maximumf %51, %52 : vector<4x32xf32>
    %c0_30 = arith.constant 0 : index
    %c0_31 = arith.constant 0 : index
    %54 = vector.load %arg11[%c0_30, %c0_31] : memref<4x1xf32, #tpu.memory_space<vmem>>, vector<4x1xf32>
    %55 = vector.broadcast %54 : vector<4x1xf32> to vector<4x32xf32>
    %56 = arith.minimumf %53, %55 : vector<4x32xf32>
    %57 = tpu.concatenate %56, %33 in 0 : vector<4x32xf32>, vector<4x32xf32> -> vector<8x32xf32>
    %c0_32 = arith.constant 0 : index
    %c0_33 = arith.constant 0 : index
    %58 = vector.load %arg12[%c0_32, %c0_33] : memref<8x32xf32, #tpu.memory_space<vmem>>, vector<8x32xf32>
    tpu.vector_store %arg12[%c0_32, %c0_33], %57 {strides = array<i32>} : memref<8x32xf32, #tpu.memory_space<vmem>>, vector<8x32xf32>,
    return
  }
  func.func @transform_0(%arg0: i32) -> (i32, i32) {
    %c0_i32 = arith.constant 0 : i32
    %c0_i32_0 = arith.constant 0 : i32
    return %c0_i32, %arg0 : i32, i32
  }
  func.func @transform_1(%arg0: i32) -> (i32, i32) {
    %c0_i32 = arith.constant 0 : i32
    %c0_i32_0 = arith.constant 0 : i32
    %c0_i32_1 = arith.constant 0 : i32
    return %c0_i32, %c0_i32_0 : i32, i32
  }
  func.func @transform_2(%arg0: i32) -> (i32, i32) {
    %c0_i32 = arith.constant 0 : i32
    %c0_i32_0 = arith.constant 0 : i32
    %c0_i32_1 = arith.constant 0 : i32
    return %c0_i32, %c0_i32_0 : i32, i32
  }
  func.func @transform_3(%arg0: i32) -> (i32, i32) {
    %c0_i32 = arith.constant 0 : i32
    %c0_i32_0 = arith.constant 0 : i32
    %c0_i32_1 = arith.constant 0 : i32
    return %c0_i32, %c0_i32_0 : i32, i32
  }
  func.func @transform_4(%arg0: i32) -> (i32, i32) {
    %c0_i32 = arith.constant 0 : i32
    %c0_i32_0 = arith.constant 0 : i32
    %c0_i32_1 = arith.constant 0 : i32
    return %c0_i32, %c0_i32_0 : i32, i32
  }
  func.func @transform_5(%arg0: i32) -> (i32, i32) {
    %c0_i32 = arith.constant 0 : i32
    %c0_i32_0 = arith.constant 0 : i32
    %c0_i32_1 = arith.constant 0 : i32
    return %c0_i32, %c0_i32_0 : i32, i32
  }
  func.func @transform_6(%arg0: i32) -> (i32, i32) {
    %c0_i32 = arith.constant 0 : i32
    %c0_i32_0 = arith.constant 0 : i32
    %c0_i32_1 = arith.constant 0 : i32
    return %c0_i32, %c0_i32_0 : i32, i32
  }
  func.func @transform_7(%arg0: i32) -> (i32, i32) {
    %c0_i32 = arith.constant 0 : i32
    %c0_i32_0 = arith.constant 0 : i32
    return %c0_i32, %arg0 : i32, i32
  }
  func.func @transform_8(%arg0: i32) -> (i32, i32) {
    %c0_i32 = arith.constant 0 : i32
    %c0_i32_0 = arith.constant 0 : i32
    %c0_i32_1 = arith.constant 0 : i32
    return %c0_i32, %c0_i32_0 : i32, i32
  }
  func.func @transform_9(%arg0: i32) -> (i32, i32) {
    %c0_i32 = arith.constant 0 : i32
    %c0_i32_0 = arith.constant 0 : i32
    %c0_i32_1 = arith.constant 0 : i32
    return %c0_i32, %c0_i32_0 : i32, i32
  }
  func.func @transform_10(%arg0: i32) -> (i32, i32) {
    %c0_i32 = arith.constant 0 : i32
    %c0_i32_0 = arith.constant 0 : i32
    %c0_i32_1 = arith.constant 0 : i32
    return %c0_i32, %c0_i32_0 : i32, i32
  }
  func.func @transform_11(%arg0: i32) -> (i32, i32) {
    %c0_i32 = arith.constant 0 : i32
    %c0_i32_0 = arith.constant 0 : i32
    return %c0_i32, %arg0 : i32, i32
  }
}

</mosaic_0001>

<llo_original>
// kernel: tpu_custom_call.1
$region0: #{tpu_custom_call.1}
  #allocation0 [shape = 'u32[]', space=smem, size = 0x4, offset = 0x4, fixed_abs, tag = 'smem constant byte address 0x4 - core index']
  #allocation1 [shape = 'u32[144,128]{1,0:T(1,128)}', space=vmem, size = 0x12000, scoped, tag = 'internal scratch']
  %s0 = inlined_call_operand.vmem [shape: bf16[48,32], index: 0, kind: input, shape index: {}]
  %s1 = inlined_call_operand.vmem [shape: bf16[16,48], index: 1, kind: input, shape index: {}]
  %s2 = inlined_call_operand.vmem [shape: f32[16,1], index: 2, kind: input, shape index: {}]
  %s3 = inlined_call_operand.vmem [shape: f32[32,16], index: 3, kind: input, shape index: {}]
  %s4 = inlined_call_operand.vmem [shape: f32[32,1], index: 4, kind: input, shape index: {}]
  %s5 = inlined_call_operand.vmem [shape: f32[8,32], index: 5, kind: input, shape index: {}]
  %s6 = inlined_call_operand.vmem [shape: f32[8,1], index: 6, kind: input, shape index: {}]
  %s7 = inlined_call_operand.vmem [shape: f32[4,32], index: 7, kind: input, shape index: {}]
  %s8 = inlined_call_operand.vmem [shape: f32[4,1], index: 8, kind: input, shape index: {}]
  %s9 = inlined_call_operand.vmem [shape: f32[4,1], index: 9, kind: input, shape index: {}]
  %s10 = inlined_call_operand.vmem [shape: f32[4,1], index: 10, kind: input, shape index: {}]
  %s11 = inlined_call_operand.hbm [shape: f32[8,32], index: 11, kind: output, shape index: {}]
  %s12 = sld [smem:[#allocation0]]
  $region54: #{tpu_custom_call.1} parent=0
    _
  %s14 = ssub.s32 1, %s12
  %s15 = scalar_select 0, %s14, %s12
  $region1: #{tpu_custom_call.1} parent=0
    #allocation2 [shape = 'u8[4096]{0}', space=vmem, size = 0x1000, scoped, tag = 'output window, operand 0, single buffered']
    #allocation3 [shape = 's32[1]{0}', space=sflag, size = 0x4, scoped, tag = 'scoped memory for tpu_custom_call.1']
    %16 = vsyncpa [#allocation3], 0
    // Predicated region
    $region2: #{tpu_custom_call.1} parent=1 // pred_check
      _
    $region3: #{tpu_custom_call.1} parent=1 // pred_check_branch
      %18 = sbr.rel (0) target = $region5
    $region4: #{tpu_custom_call.1} parent=1 // pred_region
      _
    $region5: #{tpu_custom_call.1} parent=1 // pred_fallthru
      _
    // Predicated region
    $region6: #{tpu_custom_call.1} parent=1 // pred_check
      _
    $region7: #{tpu_custom_call.1} parent=1 // pred_check_branch
      %20 = sbr.rel (0) target = $region9
    $region8: #{tpu_custom_call.1} parent=1 // pred_region
      _
    $region9: #{tpu_custom_call.1} parent=1 // pred_fallthru
      _
    // Predicated region
    $region10: #{tpu_custom_call.1} parent=1 // pred_check
      _
    $region11: #{tpu_custom_call.1} parent=1 // pred_check_branch
      %22 = sbr.rel (0) target = $region13
    $region12: #{tpu_custom_call.1} parent=1 // pred_region
      _
    $region13: #{tpu_custom_call.1} parent=1 // pred_fallthru
      _
    // Predicated region
    $region14: #{tpu_custom_call.1} parent=1 // pred_check
      _
    $region15: #{tpu_custom_call.1} parent=1 // pred_check_branch
      %24 = sbr.rel (0) target = $region17
    $region16: #{tpu_custom_call.1} parent=1 // pred_region
      _
    $region17: #{tpu_custom_call.1} parent=1 // pred_fallthru
      _
    // Predicated region
    $region18: #{tpu_custom_call.1} parent=1 // pred_check
      _
    $region19: #{tpu_custom_call.1} parent=1 // pred_check_branch
      %26 = sbr.rel (0) target = $region21
    $region20: #{tpu_custom_call.1} parent=1 // pred_region
      _
    $region21: #{tpu_custom_call.1} parent=1 // pred_fallthru
      _
    // Predicated region
    $region22: #{tpu_custom_call.1} parent=1 // pred_check
      _
    $region23: #{tpu_custom_call.1} parent=1 // pred_check_branch
      %28 = sbr.rel (0) target = $region25
    $region24: #{tpu_custom_call.1} parent=1 // pred_region
      _
    $region25: #{tpu_custom_call.1} parent=1 // pred_fallthru
      _
    // Predicated region
    $region26: #{tpu_custom_call.1} parent=1 // pred_check
      _
    $region27: #{tpu_custom_call.1} parent=1 // pred_check_branch
      %30 = sbr.rel (0) target = $region29
    $region28: #{tpu_custom_call.1} parent=1 // pred_region
      _
    $region29: #{tpu_custom_call.1} parent=1 // pred_fallthru
      _
    // Predicated region
    $region30: #{tpu_custom_call.1} parent=1 // pred_check
      _
    $region31: #{tpu_custom_call.1} parent=1 // pred_check_branch
      %32 = sbr.rel (0) target = $region33
    $region32: #{tpu_custom_call.1} parent=1 // pred_region
      _
    $region33: #{tpu_custom_call.1} parent=1 // pred_fallthru
      _
    // Predicated region
    $region34: #{tpu_custom_call.1} parent=1 // pred_check
      _
    $region35: #{tpu_custom_call.1} parent=1 // pred_check_branch
      %34 = sbr.rel (0) target = $region37
    $region36: #{tpu_custom_call.1} parent=1 // pred_region
      _
    $region37: #{tpu_custom_call.1} parent=1 // pred_fallthru
      _
    // Predicated region
    $region38: #{tpu_custom_call.1} parent=1 // pred_check
      _
    $region39: #{tpu_custom_call.1} parent=1 // pred_check_branch
      %36 = sbr.rel (0) target = $region41
    $region40: #{tpu_custom_call.1} parent=1 // pred_region
      _
    $region41: #{tpu_custom_call.1} parent=1 // pred_fallthru
      _
    // Predicated region
    $region42: #{tpu_custom_call.1} parent=1 // pred_check
      _
    $region43: #{tpu_custom_call.1} parent=1 // pred_check_branch
      %38 = sbr.rel (0) target = $region45
    $region44: #{tpu_custom_call.1} parent=1 // pred_region
      _
    $region45: #{tpu_custom_call.1} parent=1 // pred_fallthru
      _
    %v40 = vld [vmem:[%s1] sm:$0xf]
    %v41 = vld [vmem:[%s1 + $0x4] sm:$0xf]
    %v42 = vld [vmem:[%s0] sm:$0xf]
    %v43 = vld [vmem:[%s0 + $0x4] sm:$0xf]
    %v44 = vld [vmem:[%s0 + $0x8] sm:$0xf]
    %v45 = vld [vmem:[%s0 + $0xc] sm:$0xf]
    %v46 = vld [vmem:[%s0 + $0x10] sm:$0xf]
    %v47 = vld [vmem:[%s0 + $0x14] sm:$0xf]
    %v48 = vld [vmem:[%s2] sm:$0xff]
    %v49 = vld [vmem:[%s2 + $0x8] sm:$0xff]
    %51 = vset.pattern.permute.xlu0 0
    %52 = vperm.xlu0 %51, %v48
    %v53 = vpop.permute.xlu0 %52
    %56 = vset.pattern.permute.xlu0 0
    %57 = vperm.xlu0 %56, %v49
    %v58 = vpop.permute.xlu0 %57
    %v62 = vunpack.c.l.b16 %v40
    %v63 = vunpack.c.l.b16 %v41
    %v64 = vpack.c.b16 %v63, %v62
    %v71 = vunpack.c.l.b16 %v42
    %v72 = vunpack.c.l.b16 %v43
    %v73 = vunpack.c.l.b16 %v44
    %v74 = vunpack.c.l.b16 %v45
    %v75 = vunpack.c.l.b16 %v46
    %v76 = vunpack.c.l.b16 %v47
    %v77 = vpack.c.b16 %v72, %v71
    %v78 = vpack.c.b16 %v74, %v73
    %v79 = vpack.c.b16 %v76, %v75
    %vm83 = vcmask 392192
    %v85 = vsel %vm83, %v64, 0
    %87 = vmatprep.subr.bf16.mxu0 0
    %88 = vmatpush1.bf16.msra.mxu0 0
    %89 = vmatprep.subr.bf16.mxu0 0
    %90 = vmatpush1.bf16.msra.mxu0 0
    %91 = vmatprep.subr.bf16.mxu0 0
    %92 = vmatpush1.bf16.msra.mxu0 0
    %93 = vmatprep.subr.bf16.mxu0 0
    %94 = vmatpush1.bf16.msra.mxu0 0
    %95 = vmatprep.subr.bf16.mxu0 0
    %96 = vmatpush1.bf16.msra.mxu0 0
    %97 = vmatprep.subr.bf16.mxu0 0
    %98 = vmatpush1.bf16.msra.mxu0 %v79
    %99 = vmatprep.subr.bf16.mxu0 0
    %100 = vmatpush1.bf16.msra.mxu0 %v78
    %101 = vmatprep.subr.bf16.mxu0 0
    %102 = vmatpush1.bf16.msra.mxu0 %v77
    %103 = vmatprep.subr.bf16.mxu0 0
    %104 = vmatpush2.bf16.msra.mxu0 0
    %105 = vmatprep.subr.bf16.mxu0 0
    %106 = vmatpush2.bf16.msra.mxu0 0
    %107 = vmatprep.subr.bf16.mxu0 0
    %108 = vmatpush2.bf16.msra.mxu0 0
    %109 = vmatprep.subr.bf16.mxu0 0
    %110 = vmatpush2.bf16.msra.mxu0 0
    %111 = vmatprep.subr.bf16.mxu0 0
    %112 = vmatpush2.bf16.msra.mxu0 0
    %113 = vmatprep.subr.bf16.mxu0 0
    %114 = vmatpush2.bf16.msra.mxu0 0
    %115 = vmatprep.subr.bf16.mxu0 0
    %116 = vmatpush2.bf16.msra.mxu0 0
    %117 = vmatprep.subr.bf16.mxu0 0
    %118 = vmatpush2.bf16.msra.mxu0 0
    %119 = vmatprep.mubr.bf16.mxu0 0
    %120 = vmatmul.mubr.bf16.gmra.mxu0 %v85
    %v121 = vpop.f32.mrf.mxu0
    %v122 = vadd.f32 %v53, %v121
    %v123 = vpop.f32.mrf.mxu0
    %v124 = vpop.f32.mrf.mxu0
    %v125 = vadd.f32 %v58, %v124
    %v126 = vpop.f32.mrf.mxu0
    %127 = vdwg.mxu0
    %v128 = vmax.f32 %v122, 0.0
    %v129 = vmax.f32 %v125, 0.0
    %v130 = vld [vmem:[%s3] sm:$0xff]
    %v131 = vld [vmem:[%s3 + $0x8] sm:$0xff]
    %v132 = vld [vmem:[%s3 + $0x10] sm:$0xff]
    %v133 = vld [vmem:[%s3 + $0x18] sm:$0xff]
    %v134 = vld [vmem:[%s4] sm:$0xff]
    %v135 = vld [vmem:[%s4 + $0x8] sm:$0xff]
    %v136 = vld [vmem:[%s4 + $0x10] sm:$0xff]
    %v137 = vld [vmem:[%s4 + $0x18] sm:$0xff]
    %139 = vset.pattern.permute.xlu0 0
    %140 = vperm.xlu0 %139, %v134
    %v141 = vpop.permute.xlu0 %140
    %144 = vset.pattern.permute.xlu0 0
    %145 = vperm.xlu0 %144, %v135
    %v146 = vpop.permute.xlu0 %145
    %149 = vset.pattern.permute.xlu0 0
    %150 = vperm.xlu0 %149, %v136
    %v151 = vpop.permute.xlu0 %150
    %154 = vset.pattern.permute.xlu0 0
    %155 = vperm.xlu0 %154, %v137
    %v156 = vpop.permute.xlu0 %155
    %vm158 = vcmask 130048
    %v160 = vsel %vm158, %v130, 0
    %v163 = vsel %vm158, %v131, 0
    %v166 = vsel %vm158, %v132, 0
    %v169 = vsel %vm158, %v133, 0
    %171 = vmatprep.subr.mxu0 0.0
    %172 = vmatpush1.msra.mxu0 0.0
    %173 = vmatprep.subr.mxu0 0.0
    %174 = vmatpush1.msra.mxu0 0.0
    %175 = vmatprep.subr.mxu0 0.0
    %176 = vmatpush1.msra.mxu0 0.0
    %177 = vmatprep.subr.mxu0 0.0
    %178 = vmatpush1.msra.mxu0 0.0
    %179 = vmatprep.subr.mxu0 0.0
    %180 = vmatpush1.msra.mxu0 0.0
    %181 = vmatprep.subr.mxu0 0.0
    %182 = vmatpush1.msra.mxu0 0.0
    %183 = vmatprep.subr.mxu0 0.0
    %184 = vmatpush1.msra.mxu0 0.0
    %185 = vmatprep.subr.mxu0 0.0
    %186 = vmatpush1.msra.mxu0 0.0
    %187 = vmatprep.subr.mxu0 0.0
    %188 = vmatpush1.msra.mxu0 0.0
    %189 = vmatprep.subr.mxu0 0.0
    %190 = vmatpush1.msra.mxu0 0.0
    %191 = vmatprep.subr.mxu0 0.0
    %192 = vmatpush1.msra.mxu0 0.0
    %193 = vmatprep.subr.mxu0 0.0
    %194 = vmatpush1.msra.mxu0 0.0
    %195 = vmatprep.subr.mxu0 0.0
    %196 = vmatpush1.msra.mxu0 0.0
    %197 = vmatprep.subr.mxu0 0.0
    %198 = vmatpush1.msra.mxu0 0.0
    %199 = vmatprep.subr.mxu0 0.0
    %200 = vmatpush1.msra.mxu0 %v129
    %201 = vmatprep.subr.mxu0 0.0
    %202 = vmatpush1.msra.mxu0 %v128
    %203 = vmatprep.subr.mxu0 0.0
    %204 = vmatpush2.msra.mxu0 0.0
    %205 = vmatprep.subr.mxu0 0.0
    %206 = vmatpush2.msra.mxu0 0.0
    %207 = vmatprep.subr.mxu0 0.0
    %208 = vmatpush2.msra.mxu0 0.0
    %209 = vmatprep.subr.mxu0 0.0
    %210 = vmatpush2.msra.mxu0 0.0
    %211 = vmatprep.subr.mxu0 0.0
    %212 = vmatpush2.msra.mxu0 0.0
    %213 = vmatprep.subr.mxu0 0.0
    %214 = vmatpush2.msra.mxu0 0.0
    %215 = vmatprep.subr.mxu0 0.0
    %216 = vmatpush2.msra.mxu0 0.0
    %217 = vmatprep.subr.mxu0 0.0
    %218 = vmatpush2.msra.mxu0 0.0
    %219 = vmatprep.subr.mxu0 0.0
    %220 = vmatpush2.msra.mxu0 0.0
    %221 = vmatprep.subr.mxu0 0.0
    %222 = vmatpush2.msra.mxu0 0.0
    %223 = vmatprep.subr.mxu0 0.0
    %224 = vmatpush2.msra.mxu0 0.0
    %225 = vmatprep.subr.mxu0 0.0
    %226 = vmatpush2.msra.mxu0 0.0
    %227 = vmatprep.subr.mxu0 0.0
    %228 = vmatpush2.msra.mxu0 0.0
    %229 = vmatprep.subr.mxu0 0.0
    %230 = vmatpush2.msra.mxu0 0.0
    %231 = vmatprep.subr.mxu0 0.0
    %232 = vmatpush2.msra.mxu0 0.0
    %233 = vmatprep.subr.mxu0 0.0
    %234 = vmatpush2.msra.mxu0 0.0
    %235 = vmatprep.mubr.f32.mxu0 0.0
    %236 = vmatmul.mubr.f32.gmra.mxu0 %v160
    %v237 = vpop.f32.mrf.mxu0
    %v238 = vadd.f32 %v141, %v237
    %v239 = vpop.f32.mrf.mxu0
    %240 = vmatprep.mubr.f32.mxu0 0.0
    %241 = vmatmul.mubr.f32.gmra.mxu0 %v163
    %v242 = vpop.f32.mrf.mxu0
    %v243 = vadd.f32 %v146, %v242
    %v244 = vpop.f32.mrf.mxu0
    %245 = vmatprep.mubr.f32.mxu0 0.0
    %246 = vmatmul.mubr.f32.gmra.mxu0 %v166
    %v247 = vpop.f32.mrf.mxu0
    %v248 = vadd.f32 %v151, %v247
    %v249 = vpop.f32.mrf.mxu0
    %250 = vmatprep.mubr.f32.mxu0 0.0
    %251 = vmatmul.mubr.f32.gmra.mxu0 %v169
    %v252 = vpop.f32.mrf.mxu0
    %v253 = vadd.f32 %v156, %v252
    %v254 = vpop.f32.mrf.mxu0
    %255 = vdwg.mxu0
    %v256 = vmax.f32 %v238, 0.0
    %v257 = vmax.f32 %v243, 0.0
    %v258 = vmax.f32 %v248, 0.0
    %v259 = vmax.f32 %v253, 0.0
    %v260 = vld [vmem:[%s5] sm:$0xff]
    %v261 = vld [vmem:[%s6] sm:$0xff]
    %263 = vset.pattern.permute.xlu0 0
    %264 = vperm.xlu0 %263, %v261
    %v265 = vpop.permute.xlu0 %264
    %vm267 = vcmask 261120
    %v269 = vsel %vm267, %v260, 0
    %271 = vmatprep.subr.mxu0 0.0
    %272 = vmatpush1.msra.mxu0 0.0
    %273 = vmatprep.subr.mxu0 0.0
    %274 = vmatpush1.msra.mxu0 0.0
    %275 = vmatprep.subr.mxu0 0.0
    %276 = vmatpush1.msra.mxu0 0.0
    %277 = vmatprep.subr.mxu0 0.0
    %278 = vmatpush1.msra.mxu0 0.0
    %279 = vmatprep.subr.mxu0 0.0
    %280 = vmatpush1.msra.mxu0 0.0
    %281 = vmatprep.subr.mxu0 0.0
    %282 = vmatpush1.msra.mxu0 0.0
    %283 = vmatprep.subr.mxu0 0.0
    %284 = vmatpush1.msra.mxu0 0.0
    %285 = vmatprep.subr.mxu0 0.0
    %286 = vmatpush1.msra.mxu0 0.0
    %287 = vmatprep.subr.mxu0 0.0
    %288 = vmatpush1.msra.mxu0 0.0
    %289 = vmatprep.subr.mxu0 0.0
    %290 = vmatpush1.msra.mxu0 0.0
    %291 = vmatprep.subr.mxu0 0.0
    %292 = vmatpush1.msra.mxu0 0.0
    %293 = vmatprep.subr.mxu0 0.0
    %294 = vmatpush1.msra.mxu0 0.0
    %295 = vmatprep.subr.mxu0 0.0
    %296 = vmatpush1.msra.mxu0 %v259
    %297 = vmatprep.subr.mxu0 0.0
    %298 = vmatpush1.msra.mxu0 %v258
    %299 = vmatprep.subr.mxu0 0.0
    %300 = vmatpush1.msra.mxu0 %v257
    %301 = vmatprep.subr.mxu0 0.0
    %302 = vmatpush1.msra.mxu0 %v256
    %303 = vmatprep.subr.mxu0 0.0
    %304 = vmatpush2.msra.mxu0 0.0
    %305 = vmatprep.subr.mxu0 0.0
    %306 = vmatpush2.msra.mxu0 0.0
    %307 = vmatprep.subr.mxu0 0.0
    %308 = vmatpush2.msra.mxu0 0.0
    %309 = vmatprep.subr.mxu0 0.0
    %310 = vmatpush2.msra.mxu0 0.0
    %311 = vmatprep.subr.mxu0 0.0
    %312 = vmatpush2.msra.mxu0 0.0
    %313 = vmatprep.subr.mxu0 0.0
    %314 = vmatpush2.msra.mxu0 0.0
    %315 = vmatprep.subr.mxu0 0.0
    %316 = vmatpush2.msra.mxu0 0.0
    %317 = vmatprep.subr.mxu0 0.0
    %318 = vmatpush2.msra.mxu0 0.0
    %319 = vmatprep.subr.mxu0 0.0
    %320 = vmatpush2.msra.mxu0 0.0
    %321 = vmatprep.subr.mxu0 0.0
    %322 = vmatpush2.msra.mxu0 0.0
    %323 = vmatprep.subr.mxu0 0.0
    %324 = vmatpush2.msra.mxu0 0.0
    %325 = vmatprep.subr.mxu0 0.0
    %326 = vmatpush2.msra.mxu0 0.0
    %327 = vmatprep.subr.mxu0 0.0
    %328 = vmatpush2.msra.mxu0 0.0
    %329 = vmatprep.subr.mxu0 0.0
    %330 = vmatpush2.msra.mxu0 0.0
    %331 = vmatprep.subr.mxu0 0.0
    %332 = vmatpush2.msra.mxu0 0.0
    %333 = vmatprep.subr.mxu0 0.0
    %334 = vmatpush2.msra.mxu0 0.0
    %335 = vmatprep.mubr.f32.mxu0 0.0
    %336 = vmatmul.mubr.f32.gmra.mxu0 %v269
    %v337 = vpop.f32.mrf.mxu0
    %v338 = vadd.f32 %v265, %v337
    %v339 = vpop.f32.mrf.mxu0
    %340 = vdwg.mxu0
    %v341 = vand.u32 2147483647, %v338
    %v342 = vsub.f32 0.0, %v341
    %v343 = vmul.f32 %v342, 1.442695
    %v344 = vpow.pop %v343
    %v345 = vadd.f32 %v344, 1.0
    %v346 = vrcp.pop %v345
    %v347 = vmul.f32 1.0, %v346
    %vm348 = vcmp.ge.f32.partialorder %v338, 0.0
    %v349 = vmul.f32 %v344, %v347
    %v350 = vsel %vm348, %v347, %v349
    %v351 = vmax.f32 %v338, -4.135
    %v352 = vmin.f32 %v351, 4.135
    %v354 = vrot.slane %v338, 6
    %vm356 = vcmask 1041408
    %v357 = vsel %vm356, %v338, %v354
    %v359 = vrot.slane %v352, 2
    %v361 = vsel %vm356, %v359, %v352
    %v362 = vld [vmem:[%s7] sm:$0xf]
    %v363 = vld [vmem:[%s8] sm:$0xf]
    %365 = vset.pattern.permute.xlu0 0
    %366 = vperm.xlu0 %365, %v363
    %v367 = vpop.permute.xlu0 %366
    %v369 = vmul.f32 %v357, %v367
    %v370 = vadd.f32 %v362, %v369
    %v371 = vld [vmem:[%s9] sm:$0xf]
    %v372 = vmul.f32 %v361, 1.442695
    %v373 = vpow.pop %v372
    %375 = vset.pattern.permute.xlu0 0
    %376 = vperm.xlu0 %375, %v371
    %v377 = vpop.permute.xlu0 %376
    %v379 = vmul.f32 %v377, %v373
    %v380 = vadd.f32 %v370, %v379
    %v381 = vmax.f32 %v380, 0.0
    %v382 = vld [vmem:[%s10] sm:$0xf]
    %384 = vset.pattern.permute.xlu0 0
    %385 = vperm.xlu0 %384, %v382
    %v386 = vpop.permute.xlu0 %385
    %v388 = vmin.f32 %v381, %v386
    %vm389 = vcmask 1043456
    %v390 = vsel %vm389, %v388, %v350
    %391 = vst.msk [vmem:[#allocation2] sm:$0xff] %vm267, %v390
    // Predicated region
    $region46: #{tpu_custom_call.1} parent=1 // pred_check
      _
    $region47: #{tpu_custom_call.1} parent=1 // pred_check_branch
      %393 = sbr.rel (0) target = $region49
    $region48: #{tpu_custom_call.1} parent=1 // pred_region
      %s395 = ssub.s32 128, 128
      %396 = vsyncadd [#allocation3], %s395
      %s398 = sshll.u32 [#allocation2], 4
      %s399 = int_to_ptr.vmem [resolvable:$true] %s398
      %401 = dma.vmem_to_hbm [thread:$0]  %s399, 128, %s11, [#allocation3]
    $region49: #{tpu_custom_call.1} parent=1 // pred_fallthru
      _
    // Predicated region
    $region50: #{tpu_custom_call.1} parent=1 // pred_check
      _
    $region51: #{tpu_custom_call.1} parent=1 // pred_check_branch
      %403 = sbr.rel (0) target = $region53
    $region52: #{tpu_custom_call.1} parent=1 // pred_region
      %404 = dma.done [#allocation3], 128
    $region53: #{tpu_custom_call.1} parent=1 // pred_fallthru
      _
    %405 = vsyncpa [#allocation3], 1

</llo_original>
